<compile_context>
chip_gen: v5e
topology: v5e:2x2
jax: 0.10.0
libtpu: 0.0.40
codegen_flags: <defaults>
</compile_context>

<pallas_src>
import functools

import jax
import jax.numpy as jnp
import numpy as np
from jax.experimental import pallas as pl
from jax.experimental.pallas import tpu as pltpu


def _round_up(x, m):
    return (x + m - 1) // m * m


# ---------------------------------------------------------------------------
# Kernel 1: step-invariant projection  bh_proj = batch_H @ W_i2h^T
# ---------------------------------------------------------------------------
def _i2h_proj_kernel(bh2d_ref, w_ref, out_ref):
    out_ref[...] = jnp.dot(
        bh2d_ref[...], w_ref[...], preferred_element_type=jnp.float32
    ).astype(out_ref.dtype)


def precompute_bh_proj(batch_H, w_i2h, *, compute_dtype=jnp.bfloat16,
                       block_rows=512):
    """(B, T, D) -> (B, T, H).  Call once per sequence, reuse every step."""
    B, T, D = batch_H.shape
    H = w_i2h.shape[0]
    rows = B * T
    csz = jnp.dtype(compute_dtype).itemsize
    bh2d = batch_H.reshape(rows, D).astype(compute_dtype)
    w = w_i2h.T.astype(compute_dtype)                       # (D, H)

    # Row-blocked grid: pipelines HBM and lets v7x shard rows over its 2 TCs.
    tm = min(rows, block_rows)
    if tm >= 8:
        tm = (tm // 8) * 8
    grid = (pl.cdiv(rows, tm),)

    block_bytes = (tm * D * csz * 2        # input rows, double-buffered
                   + D * H * csz           # weight, single-buffered
                   + tm * H * csz * 2)     # output rows, double-buffered
    vmem_limit = int(min(64 * 2**20, max(32 * 2**20, 2 * block_bytes)))

    out = pl.pallas_call(
        _i2h_proj_kernel,
        out_shape=jax.ShapeDtypeStruct((rows, H), compute_dtype),
        grid=grid,
        in_specs=[
            pl.BlockSpec((tm, D), lambda i: (i, 0)),
            pl.BlockSpec((D, H), lambda i: (0, 0),
                         pipeline_mode=pl.Buffered(1)),     # weight resident
        ],
        out_specs=pl.BlockSpec((tm, H), lambda i: (i, 0)),
        compiler_params=pltpu.CompilerParams(
            dimension_semantics=("parallel",),
            vmem_limit_bytes=vmem_limit),
        cost_estimate=pl.CostEstimate(
            flops=2 * rows * D * H, transcendentals=0,
            bytes_accessed=int((rows * D + D * H + rows * H) * csz)),
    )(bh2d, w)
    return out.reshape(B, T, H)


# ---------------------------------------------------------------------------
# Kernel 2: one attention-decoder step (attention + LSTMCell)
# ---------------------------------------------------------------------------
def _attention_step_kernel(
    bhp_ref,        # (TB, T, H)  i2h(batch_H), compute dtype
    bh_ref,         # (TB, T, D)  batch_H, compute dtype
    h_ref,          # (TB, H)     prev h, f32
    c_ref,          # (TB, H)     prev c, f32
    oh_ref,         # (TB, E)     char one-hots, compute dtype
    w_score_ref,    # (1, H)      f32
    w_h_ref,        # (H, 5H)     [W_h2h^T | W_hh^T], compute dtype
    b_h_ref,        # (1, 5H)     [b_h2h | b_ih + b_hh], f32
    w_ih_x_ref,     # (D, 4H)     compute dtype
    w_ih_e_ref,     # (E, 4H)     compute dtype
    h_out_ref,      # (TB, H)  f32
    c_out_ref,      # (TB, H)  f32
    alpha_out_ref,  # (TB, TP) f32, TP = T padded up to a multiple of 128
    *, approx_recip,
):
    f32 = jnp.float32
    cd = w_h_ref.dtype
    h = h_ref[...]
    c = c_ref[...]
    TB, H = h.shape
    T = bhp_ref.shape[1]
    TP = alpha_out_ref.shape[-1]

    # One fused h-driven matmul: columns [:H] = h2h(h)+b_h2h,
    # columns [H:] = h @ W_hh^T + (b_ih + b_hh).
    hw = jnp.dot(h.astype(cd), w_h_ref[...], preferred_element_type=f32) + b_h_ref[...]
    h_proj = hw[:, :H]        # (TB, H)
    gates_h = hw[:, H:]       # (TB, 4H)

    # e = score(tanh(bh_proj + h_proj)) -> (TB, T); elementwise math in f32.
    # TODO(synk): if an EUP-bound profile shows this tanh binding on v6e/v7x,
    # compute it in bf16 there (not on v5e).
    s = jnp.tanh(bhp_ref[...].astype(f32) + h_proj[:, None, :])
    e = jnp.sum(s * w_score_ref[...][None, :, :], axis=-1)   # (TB, T)

    # Lane-dense softmax: pad scores to TP lanes with a large negative so the
    # padded alpha lanes are exactly 0 and the alpha store is an unmasked,
    # 128-wide store.
    if TP > T:
        e = jnp.concatenate(
            [e, jnp.full((TB, TP - T), -1e30, dtype=f32)], axis=-1)
    e_max = jnp.max(e, axis=-1, keepdims=True)
    p = jnp.exp(e - e_max)
    alpha = p * pl.reciprocal(jnp.sum(p, axis=-1, keepdims=True),
                              approx=approx_recip)           # (TB, TP), f32
    alpha_t = alpha[:, :T]                                    # real timesteps

    if T <= 64:
        # Small T: VPU multiply + sublane (XLU) reduce. Keeps alpha in f32
        # (no bf16 cast loss) and avoids an M=1 batched matmul that would use
        # only 1/128 (v5e) or 1/256 (v6e/v7x) of the MXU rows.
        context = jnp.sum(alpha_t[:, :, None] * bh_ref[...].astype(f32), axis=1)
    else:
        # Large T: keep the reduction on the MXU.
        context = jnp.einsum(
            "bqt,btd->bqd", alpha_t[:, None, :].astype(cd), bh_ref[...],
            preferred_element_type=f32)[:, 0, :]

    # LSTMCell gates on concat([context, char_onehots]); concat split into two
    # matmuls. PyTorch gate order: i, f, g, o.
    gates = (
        jnp.dot(context.astype(cd), w_ih_x_ref[...], preferred_element_type=f32)
        + jnp.dot(oh_ref[...], w_ih_e_ref[...], preferred_element_type=f32)
        + gates_h
    )
    i_g = jax.nn.sigmoid(gates[:, 0 * H:1 * H])
    f_g = jax.nn.sigmoid(gates[:, 1 * H:2 * H])
    g_g = jnp.tanh(gates[:, 2 * H:3 * H])
    o_g = jax.nn.sigmoid(gates[:, 3 * H:4 * H])

    c_new = f_g * c + i_g * g_g
    h_new = o_g * jnp.tanh(c_new)

    h_out_ref[...] = h_new
    c_out_ref[...] = c_new
    alpha_out_ref[...] = alpha


def _plan_blocks(B, T, TP, D, H, E, csz, block_b, budget_bytes=28 * 2**20):
    """Pick the batch block (tb) and a VMEM limit that fits v7x (64 MiB)."""
    f32sz = 4
    # Step-invariant slabs are single-buffered (pl.Buffered(1)).
    weight_bytes = ((H * 5 * H + D * 4 * H + E * 4 * H) * csz
                    + (6 * H + H) * f32sz)

    def block_bytes(tb):
        per_row_in = (T * H + T * D + E) * csz + 2 * H * f32sz
        per_row_out = (2 * H + TP) * f32sz
        return 2 * tb * (per_row_in + per_row_out)          # double-buffered

    if block_b is not None:
        tb = min(block_b, B)
    else:
        # Default: several grid steps (DMA/compute overlap; 2nd TC on v7x),
        # shrunk until the double-buffered working set fits the budget.
        tb = min(B, 128)
        if tb >= 8:
            tb = (tb // 8) * 8
            while tb > 8 and weight_bytes + block_bytes(tb) > budget_bytes:
                tb -= 8
    vmem_limit = int(min(64 * 2**20,
                         max(32 * 2**20,
                             int(1.5 * (weight_bytes + block_bytes(tb))))))
    return tb, vmem_limit


def attention_step(prev_hidden, bh_proj, batch_H, char_onehots, params,
                   *, compute_dtype=jnp.bfloat16, block_b=None,
                   approx_recip=None):
    """One decode step given a precomputed bh_proj.

    block_b, if given, must be a multiple of 8 (or >= B); default is chosen
    automatically so the grid has several steps and fits the VMEM budget.
    """
    h_prev, c_prev = prev_hidden
    B, T, D = batch_H.shape
    H = h_prev.shape[-1]
    E = char_onehots.shape[-1]
    cd = compute_dtype
    f32 = jnp.float32
    if approx_recip is None:
        # Keep the f32 path bit-faithful to the reference; use the EUP vrcp on
        # the (default) reduced-precision path.
        approx_recip = jnp.dtype(cd) != jnp.dtype(jnp.float32)

    TP = _round_up(T, 128)
    csz = jnp.dtype(cd).itemsize

    # Wrapper-side weight plumbing (constant-folded / hoisted under jit).
    w_h_fused = jnp.concatenate(
        [params["w_h2h"].T, params["w_hh"].T], axis=1).astype(cd)        # (H, 5H)
    b_h_fused = jnp.concatenate(
        [params["b_h2h"], params["b_ih"] + params["b_hh"]]
    ).reshape(1, 5 * H).astype(f32)                                      # (1, 5H)
    w_score = params["w_score"].reshape(1, H).astype(f32)
    w_ih = params["w_ih"]
    w_ih_x = w_ih[:, :D].T.astype(cd)                                    # (D, 4H)
    w_ih_e = w_ih[:, D:].T.astype(cd)                                    # (E, 4H)

    bhp = bh_proj.astype(cd)
    bh = batch_H.astype(cd)
    oh = char_onehots.astype(cd)
    h_in = h_prev.astype(f32)
    c_in = c_prev.astype(f32)

    tb, vmem_limit = _plan_blocks(B, T, TP, D, H, E, csz, block_b)
    grid = (pl.cdiv(B, tb),)

    b3 = lambda i: (i, 0, 0)
    b2 = lambda i: (i, 0)
    w2 = lambda i: (0, 0)
    resident = dict(pipeline_mode=pl.Buffered(1))   # invariant weights: 1 buffer

    in_specs = [
        pl.BlockSpec((tb, T, H), b3),               # bh_proj (streamed)
        pl.BlockSpec((tb, T, D), b3),               # batch_H (streamed)
        pl.BlockSpec((tb, H), b2),                  # h
        pl.BlockSpec((tb, H), b2),                  # c
        pl.BlockSpec((tb, E), b2),                  # one-hots
        pl.BlockSpec((1, H), w2, **resident),       # w_score
        pl.BlockSpec((H, 5 * H), w2, **resident),   # fused h weights
        pl.BlockSpec((1, 5 * H), w2, **resident),   # fused bias
        pl.BlockSpec((D, 4 * H), w2, **resident),   # w_ih (context part)
        pl.BlockSpec((E, 4 * H), w2, **resident),   # w_ih (onehot part)
    ]
    out_specs = (
        pl.BlockSpec((tb, H), b2),
        pl.BlockSpec((tb, H), b2),
        pl.BlockSpec((tb, TP), b2),                 # lane-dense alpha slab
    )

    flops = (2 * B * H * 5 * H + 2 * B * T * H + 2 * B * T * D
             + 2 * B * (D + E) * 4 * H)
    transcendentals = B * T * H + B * TP + 6 * B * H
    bytes_accessed = int(
        (B * T * H + B * T * D + B * E + H * 5 * H + (D + E) * 4 * H) * csz
        + (2 * B * H + 7 * H) * 4
        + (2 * B * H + B * TP) * 4)

    kernel = functools.partial(_attention_step_kernel,
                               approx_recip=bool(approx_recip))

    h_new, c_new, alpha_pad = pl.pallas_call(
        kernel,
        out_shape=(
            jax.ShapeDtypeStruct((B, H), f32),
            jax.ShapeDtypeStruct((B, H), f32),
            jax.ShapeDtypeStruct((B, TP), f32),
        ),
        grid=grid,
        in_specs=in_specs,
        out_specs=out_specs,
        input_output_aliases={2: 0, 3: 1},   # h_prev -> h_out, c_prev -> c_out
        compiler_params=pltpu.CompilerParams(
            dimension_semantics=("parallel",),
            vmem_limit_bytes=vmem_limit),
        cost_estimate=pl.CostEstimate(
            flops=flops, transcendentals=transcendentals,
            bytes_accessed=bytes_accessed),
    )(bhp, bh, h_in, c_in, oh, w_score, w_h_fused, b_h_fused, w_ih_x, w_ih_e)

    alpha = alpha_pad[:, :T].reshape(B, T, 1)
    return (h_new, c_new), alpha


def attention_cell(prev_hidden, batch_H, char_onehots, params,
                   *, compute_dtype=jnp.bfloat16, block_b=None,
                   approx_recip=None):
    """Pallas implementation of AttentionCell.forward (single step).

    For an autoregressive decoder, call precompute_bh_proj once per sequence
    and attention_step once per step.
    """
    bh_proj = precompute_bh_proj(batch_H, params["w_i2h"],
                                 compute_dtype=compute_dtype)
    return attention_step(prev_hidden, bh_proj, batch_H, char_onehots, params,
                          compute_dtype=compute_dtype, block_b=block_b,
                          approx_recip=approx_recip)


# ---------------------------------------------------------------------------
# Pure-JAX reference (mirrors the PyTorch module exactly)
# ---------------------------------------------------------------------------
def attention_cell_ref(prev_hidden, batch_H, char_onehots, params):
    h_prev, c_prev = prev_hidden
    H = h_prev.shape[-1]

    bh_proj = jnp.einsum("btd,hd->bth", batch_H, params["w_i2h"])
    h_proj = h_prev @ params["w_h2h"].T + params["b_h2h"]
    e = jnp.einsum("bth,oh->bto", jnp.tanh(bh_proj + h_proj[:, None, :]),
                   params["w_score"].reshape(1, H))          # (B, T, 1)
    alpha = jax.nn.softmax(e, axis=1)                        # (B, T, 1)
    context = jnp.einsum("bto,btd->bd", alpha, batch_H)      # (B, D)
    concat = jnp.concatenate([context, char_onehots], axis=1)

    gates = (concat @ params["w_ih"].T + params["b_ih"]
             + h_prev @ params["w_hh"].T + params["b_hh"])
    i_g = jax.nn.sigmoid(gates[:, 0 * H:1 * H])
    f_g = jax.nn.sigmoid(gates[:, 1 * H:2 * H])
    g_g = jnp.tanh(gates[:, 2 * H:3 * H])
    o_g = jax.nn.sigmoid(gates[:, 3 * H:4 * H])
    c_new = f_g * c_prev + i_g * g_g
    h_new = o_g * jnp.tanh(c_new)
    return (h_new, c_new), alpha


def init_params(key, input_size, hidden_size, num_embeddings):
    ks = jax.random.split(key, 7)
    scale = 0.1
    H, D, E = hidden_size, input_size, num_embeddings
    return {
        "w_i2h": scale * jax.random.normal(ks[0], (H, D), jnp.float32),
        "w_h2h": scale * jax.random.normal(ks[1], (H, H), jnp.float32),
        "b_h2h": scale * jax.random.normal(ks[2], (H,), jnp.float32),
        "w_score": scale * jax.random.normal(ks[3], (1, H), jnp.float32),
        "w_ih": scale * jax.random.normal(ks[4], (4 * H, D + E), jnp.float32),
        "b_ih": scale * jax.random.normal(ks[5], (4 * H,), jnp.float32),
        "w_hh": scale * jax.random.normal(ks[6], (4 * H, H), jnp.float32),
        "b_hh": jnp.zeros((4 * H,), jnp.float32),
    }


if __name__ == "__main__":
    B, T, D, H, E = 2, 8, 32, 32, 8   # batch, seq, input_size, hidden_size, num_embeddings

    key = jax.random.PRNGKey(0)
    k_params, k_bh, k_h, k_c, k_oh = jax.random.split(key, 5)

    params = init_params(k_params, D, H, E)
    batch_H = jax.random.normal(k_bh, (B, T, D), jnp.float32)
    h_prev = jax.random.normal(k_h, (B, H), jnp.float32)
    c_prev = jax.random.normal(k_c, (B, H), jnp.float32)
    onehot_idx = jax.random.randint(k_oh, (B,), 0, E)
    char_onehots = jax.nn.one_hot(onehot_idx, E, dtype=jnp.float32)

    (h_ref, c_ref), alpha_ref = attention_cell_ref(
        (h_prev, c_prev), batch_H, char_onehots, params)

    # f32 matmul path with exact softmax divide: semantics check vs reference.
    (h_f32, c_f32), a_f32 = attention_cell(
        (h_prev, c_prev), batch_H, char_onehots, params,
        compute_dtype=jnp.float32)
    jax.block_until_ready((h_f32, c_f32, a_f32))
    np.testing.assert_allclose(np.asarray(h_f32), np.asarray(h_ref), rtol=1e-5, atol=1e-5)
    np.testing.assert_allclose(np.asarray(c_f32), np.asarray(c_ref), rtol=1e-5, atol=1e-5)
    np.testing.assert_allclose(np.asarray(a_f32), np.asarray(alpha_ref), rtol=1e-5, atol=1e-5)

    # bf16-matmul path (default; recommended on v6e/v7x), f32 accumulation,
    # approx EUP reciprocal for the softmax denominator.
    (h_bf, c_bf), a_bf = attention_cell(
        (h_prev, c_prev), batch_H, char_onehots, params,
        compute_dtype=jnp.bfloat16)
    jax.block_until_ready((h_bf, c_bf, a_bf))
    np.testing.assert_allclose(np.asarray(h_bf), np.asarray(h_ref), rtol=5e-2, atol=5e-2)
    np.testing.assert_allclose(np.asarray(c_bf), np.asarray(c_ref), rtol=5e-2, atol=5e-2)
    np.testing.assert_allclose(np.asarray(a_bf), np.asarray(alpha_ref), rtol=5e-2, atol=5e-2)

    print("KERNEL_OK")
</pallas_src>

<mosaic_0001>
module attributes {stable_mosaic.version = 11 : i64} {
  func.func @_i2h_proj_kernel(%arg0: i32, %arg1: memref<16x32xf32, #tpu.memory_space<vmem>>, %arg2: memref<32x32xf32, #tpu.memory_space<vmem>>, %arg3: memref<16x32xf32, #tpu.memory_space<vmem>>) attributes {dimension_semantics = [#tpu.dimension_semantics<parallel>], iteration_bounds = array<i64: 1>, scalar_prefetch = 0 : i64, scratch_operands = 0 : i64, tpu.core_type = #tpu.core_type<tc>, window_params = [{transform_indices = @transform_0, window_bounds = array<i64: 16, 32>}, {pipeline_mode = #tpu.pipeline_mode<synchronous>, transform_indices = @transform_1, window_bounds = array<i64: 32, 32>}, {transform_indices = @transform_2, window_bounds = array<i64: 16, 32>}]} {
    %c0 = arith.constant 0 : index
    %c0_0 = arith.constant 0 : index
    %0 = vector.load %arg1[%c0, %c0_0] : memref<16x32xf32, #tpu.memory_space<vmem>>, vector<16x32xf32>
    %c0_1 = arith.constant 0 : index
    %c0_2 = arith.constant 0 : index
    %1 = vector.load %arg2[%c0_1, %c0_2] : memref<32x32xf32, #tpu.memory_space<vmem>>, vector<32x32xf32>
    %cst = arith.constant dense<0.000000e+00> : vector<16x32xf32>
    %2 = tpu.matmul %0, %1, %cst {dimension_numbers = #tpu.dot_dimension_numbers<[1], [0], [0], [1], [0, 0, 1, 1], [], []>} : vector<16x32xf32>, vector<32x32xf32>, vector<16x32xf32> -> vector<16x32xf32>
    %c0_3 = arith.constant 0 : index
    %c0_4 = arith.constant 0 : index
    %3 = vector.load %arg3[%c0_3, %c0_4] : memref<16x32xf32, #tpu.memory_space<vmem>>, vector<16x32xf32>
    tpu.vector_store %arg3[%c0_3, %c0_4], %2 {strides = array<i32>} : memref<16x32xf32, #tpu.memory_space<vmem>>, vector<16x32xf32>,
    return
  }
  func.func @transform_0(%arg0: i32) -> (i32, i32) {
    %c0_i32 = arith.constant 0 : i32
    %c0_i32_0 = arith.constant 0 : i32
    return %arg0, %c0_i32 : i32, i32
  }
  func.func @transform_1(%arg0: i32) -> (i32, i32) {
    %c0_i32 = arith.constant 0 : i32
    %c0_i32_0 = arith.constant 0 : i32
    %c0_i32_1 = arith.constant 0 : i32
    return %c0_i32, %c0_i32_0 : i32, i32
  }
  func.func @transform_2(%arg0: i32) -> (i32, i32) {
    %c0_i32 = arith.constant 0 : i32
    %c0_i32_0 = arith.constant 0 : i32
    return %arg0, %c0_i32 : i32, i32
  }
}

</mosaic_0001>

<llo_original>
// kernel: tpu_custom_call.1
$region0: #{tpu_custom_call.1}
  #allocation0 [shape = 'u32[]', space=smem, size = 0x4, offset = 0x4, fixed_abs, tag = 'smem constant byte address 0x4 - core index']
  #allocation1 [shape = 'u32[72,128]{1,0:T(1,128)}', space=vmem, size = 0x9000, scoped, tag = 'internal scratch']
  %s0 = inlined_call_operand.hbm [shape: f32[16,32], index: 0, kind: input, shape index: {}]
  %s1 = inlined_call_operand.hbm [shape: f32[32,32], index: 1, kind: input, shape index: {}]
  %s2 = inlined_call_operand.hbm [shape: f32[16,32], index: 2, kind: output, shape index: {}]
  %s3 = sld [smem:[#allocation0]]
  $region26: #{tpu_custom_call.1} parent=0
    _
  %s5 = ssub.s32 1, %s3
  %s6 = scalar_select 0, %s5, %s3
  $region1: #{tpu_custom_call.1} parent=0
    #allocation2 [shape = 'u8[8192]{0}', space=vmem, size = 0x2000, scoped, tag = 'input window, operand 0, single buffered']
    #allocation3 [shape = 's32[1]{0}', space=sflag, size = 0x4, scoped, tag = 'scoped memory for tpu_custom_call.1']
    #allocation4 [shape = 's32[1]{0}', space=sflag, size = 0x4, scoped, tag = 'scoped memory for tpu_custom_call.1']
    #allocation5 [shape = 'u8[16384]{0}', space=vmem, size = 0x4000, scoped, tag = 'input window, operand 1, single buffered']
    #allocation6 [shape = 's32[1]{0}', space=sflag, size = 0x4, scoped, tag = 'scoped memory for tpu_custom_call.1']
    #allocation7 [shape = 'u8[8192]{0}', space=vmem, size = 0x2000, scoped, tag = 'output window, operand 0, single buffered']
    %7 = vsyncpa [#allocation3], 0
    %8 = vsyncpa [#allocation6], 0
    %9 = vsyncpa [#allocation4], 0
    // Predicated region
    $region2: #{tpu_custom_call.1} parent=1 // pred_check
      _
    $region3: #{tpu_custom_call.1} parent=1 // pred_check_branch
      %11 = sbr.rel (0) target = $region5
    $region4: #{tpu_custom_call.1} parent=1 // pred_region
      %13 = vsyncadd [#allocation3], 0
      %s14 = sshll.u32 %s0, 4
      %s15 = int_to_ptr.hbm [resolvable:$true] %s14
      %s16 = sshll.u32 [#allocation2], 4
      %s17 = int_to_ptr.vmem [resolvable:$true] %s16
      %22 = dma.hbm_to_vmem [thread:$0]  %s15, 256, %s17, [#allocation3], 128, 128, 8
    $region5: #{tpu_custom_call.1} parent=1 // pred_fallthru
      _
    // Predicated region
    $region6: #{tpu_custom_call.1} parent=1 // pred_check
      _
    $region7: #{tpu_custom_call.1} parent=1 // pred_check_branch
      %24 = sbr.rel (0) target = $region9
    $region8: #{tpu_custom_call.1} parent=1 // pred_region
      %26 = vsyncadd [#allocation6], 0
      %s27 = sshll.u32 %s1, 4
      %s28 = int_to_ptr.hbm [resolvable:$true] %s27
      %s29 = sshll.u32 [#allocation5], 4
      %s30 = int_to_ptr.vmem [resolvable:$true] %s29
      %35 = dma.hbm_to_vmem [thread:$0]  %s28, 512, %s30, [#allocation6], 128, 128, 8
    $region9: #{tpu_custom_call.1} parent=1 // pred_fallthru
      _
    // Predicated region
    $region10: #{tpu_custom_call.1} parent=1 // pred_check
      _
    $region11: #{tpu_custom_call.1} parent=1 // pred_check_branch
      %37 = sbr.rel (0) target = $region13
    $region12: #{tpu_custom_call.1} parent=1 // pred_region
      %39 = dma.done [#allocation3], 256
    $region13: #{tpu_custom_call.1} parent=1 // pred_fallthru
      _
    // Predicated region
    $region14: #{tpu_custom_call.1} parent=1 // pred_check
      _
    $region15: #{tpu_custom_call.1} parent=1 // pred_check_branch
      %41 = sbr.rel (0) target = $region17
    $region16: #{tpu_custom_call.1} parent=1 // pred_region
      %43 = dma.done [#allocation6], 512
    $region17: #{tpu_custom_call.1} parent=1 // pred_fallthru
      _
    %v44 = vld [vmem:[#allocation2] sm:$0xff]
    %v45 = vld [vmem:[#allocation2 + $0x8] sm:$0xff]
    %v46 = vld [vmem:[#allocation5] sm:$0xff]
    %v47 = vld [vmem:[#allocation5 + $0x8] sm:$0xff]
    %v48 = vld [vmem:[#allocation5 + $0x10] sm:$0xff]
    %v49 = vld [vmem:[#allocation5 + $0x18] sm:$0xff]
    %vm50 = vcmask 261120
    %v52 = vsel %vm50, %v44, 0
    %v55 = vsel %vm50, %v45, 0
    %57 = vmatpush.msra.mxu0 0.0
    %58 = vmatpush.msra.mxu0 0.0
    %59 = vmatpush.msra.mxu0 0.0
    %60 = vmatpush.msra.mxu0 0.0
    %61 = vmatpush.msra.mxu0 0.0
    %62 = vmatpush.msra.mxu0 0.0
    %63 = vmatpush.msra.mxu0 0.0
    %64 = vmatpush.msra.mxu0 0.0
    %65 = vmatpush.msra.mxu0 0.0
    %66 = vmatpush.msra.mxu0 0.0
    %67 = vmatpush.msra.mxu0 0.0
    %68 = vmatpush.msra.mxu0 0.0
    %69 = vmatpush.msra.mxu0 %v49
    %70 = vmatpush.msra.mxu0 %v48
    %71 = vmatpush.msra.mxu0 %v47
    %72 = vmatpush.msra.mxu0 %v46
    %73 = vmatmul.f32.gmra.mxu0 %v52
    %v74 = vpop.f32.mrf.mxu0
    %v75 = vadd.f32 0.0, %v74
    %76 = vmatmul.f32.gmra.mxu0 %v55
    %v77 = vpop.f32.mrf.mxu0
    %v78 = vadd.f32 0.0, %v77
    %79 = vdwg.mxu0
    %80 = vst.msk [vmem:[#allocation7] sm:$0xff] %vm50, %v75
    %81 = vst.msk [vmem:[#allocation7 + $0x8] sm:$0xff] %vm50, %v78
    // Predicated region
    $region18: #{tpu_custom_call.1} parent=1 // pred_check
      _
    $region19: #{tpu_custom_call.1} parent=1 // pred_check_branch
      %83 = sbr.rel (0) target = $region21
    $region20: #{tpu_custom_call.1} parent=1 // pred_region
      %85 = vsyncadd [#allocation4], 0
      %s86 = sshll.u32 [#allocation7], 4
      %s87 = int_to_ptr.vmem [resolvable:$true] %s86
      %s88 = sshll.u32 %s2, 4
      %s89 = int_to_ptr.hbm [resolvable:$true] %s88
      %94 = dma.vmem_to_hbm [thread:$0]  %s87, 256, %s89, [#allocation4], 128, 128, 8
    $region21: #{tpu_custom_call.1} parent=1 // pred_fallthru
      _
    // Predicated region
    $region22: #{tpu_custom_call.1} parent=1 // pred_check
      _
    $region23: #{tpu_custom_call.1} parent=1 // pred_check_branch
      %96 = sbr.rel (0) target = $region25
    $region24: #{tpu_custom_call.1} parent=1 // pred_region
      %98 = dma.done [#allocation4], 256
    $region25: #{tpu_custom_call.1} parent=1 // pred_fallthru
      _
    %99 = vsyncpa [#allocation3], 1
    %100 = vsyncpa [#allocation6], 1
    %101 = vsyncpa [#allocation4], 1

</llo_original>
